<compile_context>
chip_gen: v6e
topology: v6e:2x2x1
jax: 0.10.0
libtpu: 0.0.40
codegen_flags: <defaults>
</compile_context>

<pallas_src>
import functools
import math

import jax
import jax.numpy as jnp
from jax.experimental import pallas as pl
from jax.experimental.pallas import tpu as pltpu

# ----------------------------- model dims -----------------------------------
HIDDEN = 768          # BERT hidden size (CLS output width)
NUM_HEADS = 12
HEAD_DIM = HIDDEN // NUM_HEADS
FFN = 4 * HIDDEN
NUM_LAYERS = 2        # TODO(synk): real bert-base-cased has 12 layers; 2 synthetic layers stand in.
VOCAB = 128
AUDIO_FEAT = 2048     # ResNet-152 avg-pool feature width
CONV1_CH = 128        # lane-dense (>=128 lanes) so conv1 intermediate avoids masked stores
CONV1_K = 9 * 3       # 3x3 kernel x 3 input channels
CONV1_K_PAD = 128     # conv1 contraction padded to a full lane width
LN_EPS = 1e-12


# ============================== small helpers ================================
def _pick_tile(dim, candidates):
    for t in candidates:
        if dim >= t and dim % t == 0:
            return t
    return dim


def _vmem_limit(block_bytes, scratch_bytes=0):
    # generation-safe cap: 48 MiB leaves headroom on v7x (64 MiB / TensorCore)
    est = int(block_bytes) + int(scratch_bytes) + (4 << 20)
    return int(min(max(est, 8 << 20), 48 << 20))


def _weight_spec(tk, tn, deep):
    idx = lambda m, n, k: (k, n)
    if deep:
        try:
            # tiny-M matmuls are weight-DMA bound: 3-deep buffering hides HBM latency
            return pl.BlockSpec((tk, tn), idx, pipeline_mode=pl.Buffered(3))
        except (TypeError, AttributeError):
            pass
    return pl.BlockSpec((tk, tn), idx)


# =============================== kernels =====================================
def _linear_kernel(*refs, activation, fuse_ln, multi_k, ln_eps):
    """acc += x @ w over the K grid axis; bias/act (+ residual-add + LayerNorm) fused
    into the last-K-step epilogue."""
    if fuse_ln:
        x_ref, w_ref, b_ref, r_ref, g_ref, bt_ref, o_ref, *scratch = refs
    else:
        x_ref, w_ref, b_ref, o_ref, *scratch = refs
        r_ref = g_ref = bt_ref = None

    def epilogue(acc):
        y = acc + b_ref[...].astype(jnp.float32)
        if activation == "relu":
            y = jnp.maximum(y, 0.0)
        elif activation == "gelu":
            # TODO(synk): bert-base-cased uses exact erf GELU; tanh approx drifts slightly.
            y = jax.nn.gelu(y, approximate=True)
        if fuse_ln:
            y = y + r_ref[...].astype(jnp.float32)
            mu = jnp.mean(y, axis=-1, keepdims=True)
            var = jnp.mean((y - mu) * (y - mu), axis=-1, keepdims=True)
            y = (y - mu) * jax.lax.rsqrt(var + ln_eps)
            y = y * g_ref[...].astype(jnp.float32) + bt_ref[...].astype(jnp.float32)
        o_ref[...] = y.astype(o_ref.dtype)

    if multi_k:
        acc_ref = scratch[0]

        @pl.when(pl.program_id(2) == 0)
        def _():
            acc_ref[...] = jnp.zeros_like(acc_ref)

        acc_ref[...] += jnp.dot(x_ref[...], w_ref[...],
                                preferred_element_type=jnp.float32)

        @pl.when(pl.program_id(2) == pl.num_programs(2) - 1)
        def _():
            epilogue(acc_ref[...])
    else:
        # single-K-step specialization: no accumulator scratch, straight to o_ref
        epilogue(jnp.dot(x_ref[...], w_ref[...],
                         preferred_element_type=jnp.float32))


def _attention_kernel(q_ref, k_ref, v_ref, bias_ref, o_ref, *, scale):
    q = q_ref[...]                                  # (B*nH, S, dh) bf16
    k = k_ref[...]
    v = v_ref[...]
    s = jnp.einsum("hqd,hkd->hqk", q, k,
                   preferred_element_type=jnp.float32) * scale
    s = s + bias_ref[...]                           # (B*nH, 1, S) additive mask bias
    m = jnp.max(s, axis=-1, keepdims=True)
    p = jnp.exp(s - m)
    inv = pl.reciprocal(jnp.sum(p, axis=-1, keepdims=True), approx=True)
    p = p * inv
    o_ref[...] = jnp.einsum("hqk,hkd->hqd", p.astype(q.dtype), v,
                            preferred_element_type=jnp.float32).astype(o_ref.dtype)


def _layernorm_kernel(x_ref, g_ref, b_ref, o_ref, *, eps):
    x = x_ref[...].astype(jnp.float32)
    mu = jnp.mean(x, axis=-1, keepdims=True)
    var = jnp.mean((x - mu) * (x - mu), axis=-1, keepdims=True)
    y = (x - mu) * jax.lax.rsqrt(var + eps)
    o_ref[...] = (y * g_ref[...] + b_ref[...]).astype(o_ref.dtype)


def _audio_branch_kernel(p1_ref, w1_ref, b1_ref, w2_ref, b2_ref, o_ref,
                         h1pad_ref, acc_ref, *, H, W, C1):
    """Fused conv1(3x3)+relu -> conv2(3x3)+relu -> global-avg-pool for one batch item.
    conv1 output never touches HBM; conv2 im2col is fused as 9 shifted-window matmuls;
    only the pooled (1, C2) row is written back."""
    HW = H * W
    # conv1: im2col'ed (and K-padded to 128 lanes) in glue, tiny per-pixel footprint
    h1 = jnp.dot(p1_ref[0], w1_ref[...], preferred_element_type=jnp.float32)
    h1 = jnp.maximum(h1 + b1_ref[...].astype(jnp.float32), 0.0)          # (HW, C1)

    # zero-padded (H+2, W+2, C1) halo buffer in VMEM
    h1pad_ref[...] = jnp.zeros_like(h1pad_ref)
    h1pad_ref[1:H + 1, 1:W + 1, :] = h1.astype(h1pad_ref.dtype).reshape(H, W, C1)

    # conv2 as 9 shifted-window matmuls accumulated in VMEM (fused im2col)
    acc_ref[...] = jnp.zeros_like(acc_ref)
    for idx in range(9):
        di, dj = idx // 3, idx % 3
        patch = h1pad_ref[di:di + H, dj:dj + W, :].reshape(HW, C1)
        acc_ref[...] += jnp.dot(patch, w2_ref[idx],
                                preferred_element_type=jnp.float32)

    h2 = jnp.maximum(acc_ref[...] + b2_ref[...].astype(jnp.float32), 0.0)  # (HW, C2)
    # fused global average pool
    o_ref[0] = (jnp.sum(h2, axis=0, keepdims=True) * (1.0 / HW)).astype(o_ref.dtype)


def _fusion_head_kernel(t_ref, a_ref, wt_ref, wa_ref, b_ref, o_ref):
    # concat([text, audio], 1) @ W + b  ==  text @ W[:768] + audio @ W[768:] + b
    # TODO(synk): nn.Dropout(0.5) reproduced with eval-mode semantics (identity);
    # a train-mode mask would use pltpu.prng_seed + pltpu.prng_random_bits.
    y = jnp.dot(t_ref[...], wt_ref[...], preferred_element_type=jnp.float32)
    y = y + jnp.dot(a_ref[...], wa_ref[...], preferred_element_type=jnp.float32)
    o_ref[...] = (y + b_ref[...].astype(jnp.float32)).astype(o_ref.dtype)


# ============================ kernel wrappers ================================
def linear(x, w, b, activation="none", residual=None, ln_gamma=None,
           ln_beta=None, out_dtype=jnp.bfloat16):
    """y = act(x @ w + b); optionally followed by fused residual-add + LayerNorm."""
    M, K = x.shape
    _, N = w.shape
    fuse_ln = residual is not None

    x = x.astype(jnp.bfloat16)
    w = w.astype(jnp.bfloat16)
    b = b.astype(jnp.float32).reshape(1, N)

    tm = _pick_tile(M, (256, 128))
    tk = _pick_tile(K, (512, 256))
    tn = N if fuse_ln else _pick_tile(N, (512, 256))   # LN needs the full hidden dim
    mt, nt, kt = M // tm, N // tn, K // tk
    multi_k = kt > 1
    deep_w = (M <= 64) and (nt * kt >= 3)              # weight-streaming bound regime

    in_specs = [
        pl.BlockSpec((tm, tk), lambda m, n, k: (m, k)),
        _weight_spec(tk, tn, deep_w),
        pl.BlockSpec((1, tn), lambda m, n, k: (0, n)),
    ]
    args = [x, w, b]
    if fuse_ln:
        in_specs += [
            pl.BlockSpec((tm, tn), lambda m, n, k: (m, n)),
            pl.BlockSpec((1, tn), lambda m, n, k: (0, n)),
            pl.BlockSpec((1, tn), lambda m, n, k: (0, n)),
        ]
        args += [residual.astype(jnp.bfloat16),
                 ln_gamma.astype(jnp.float32).reshape(1, N),
                 ln_beta.astype(jnp.float32).reshape(1, N)]

    scratch = [pltpu.VMEM((tm, tn), jnp.float32)] if multi_k else []

    out_bytes = jnp.dtype(out_dtype).itemsize
    blk = (2 * tm * tk * 2 + (3 if deep_w else 2) * tk * tn * 2
           + 2 * tn * 4 + 2 * tm * tn * out_bytes)
    if fuse_ln:
        blk += 2 * tm * tn * 2 + 4 * tn * 4
    scr = tm * tn * 4 if multi_k else 0

    kernel = functools.partial(_linear_kernel, activation=activation,
                               fuse_ln=fuse_ln, multi_k=multi_k, ln_eps=LN_EPS)
    return pl.pallas_call(
        kernel,
        out_shape=jax.ShapeDtypeStruct((M, N), out_dtype),
        grid_spec=pltpu.PrefetchScalarGridSpec(
            num_scalar_prefetch=0,
            grid=(mt, nt, kt),
            in_specs=in_specs,
            out_specs=pl.BlockSpec((tm, tn), lambda m, n, k: (m, n)),
            scratch_shapes=scratch,
        ),
        compiler_params=pltpu.CompilerParams(
            dimension_semantics=("parallel", "parallel", "arbitrary"),
            vmem_limit_bytes=_vmem_limit(blk, scr),
        ),
    )(*args)


def attention(q, k, v, mask_bias):
    # whole folded (B*nH, S, dh) problem is tiny -> one grid step, whole block in VMEM
    BH, S, DH = q.shape
    kernel = functools.partial(_attention_kernel, scale=1.0 / math.sqrt(DH))
    return pl.pallas_call(
        kernel,
        out_shape=jax.ShapeDtypeStruct((BH, S, DH), q.dtype),
    )(q, k, v, mask_bias)


def layernorm(x, gamma, beta, out_dtype=jnp.bfloat16):
    M, H = x.shape
    kernel = functools.partial(_layernorm_kernel, eps=LN_EPS)
    return pl.pallas_call(
        kernel,
        out_shape=jax.ShapeDtypeStruct((M, H), out_dtype),
    )(x.astype(jnp.float32), gamma.astype(jnp.float32).reshape(1, H),
      beta.astype(jnp.float32).reshape(1, H))


def audio_branch(p1, w1, b1, w2, b2, H, W):
    """p1: (B, H*W, K1pad) conv1 im2col; returns pooled (B, AUDIO_FEAT) features."""
    B, HW, K1 = p1.shape
    C1 = w1.shape[1]
    C2 = w2.shape[2]
    kernel = functools.partial(_audio_branch_kernel, H=H, W=W, C1=C1)

    blk = 2 * (HW * K1 * 2 + K1 * C1 * 2 + C1 * 4 + 9 * C1 * C2 * 2 + 2 * C2 * 4)
    scr = (H + 2) * (W + 2) * C1 * 2 + HW * C2 * 4

    out = pl.pallas_call(
        kernel,
        out_shape=jax.ShapeDtypeStruct((B, 1, C2), jnp.float32),
        grid_spec=pltpu.PrefetchScalarGridSpec(
            num_scalar_prefetch=0,
            grid=(B,),
            in_specs=[
                pl.BlockSpec((1, HW, K1), lambda bi: (bi, 0, 0)),
                pl.BlockSpec((K1, C1), lambda bi: (0, 0)),
                pl.BlockSpec((1, C1), lambda bi: (0, 0)),
                pl.BlockSpec((9, C1, C2), lambda bi: (0, 0, 0)),
                pl.BlockSpec((1, C2), lambda bi: (0, 0)),
            ],
            out_specs=pl.BlockSpec((1, 1, C2), lambda bi: (bi, 0, 0)),
            scratch_shapes=[
                pltpu.VMEM((H + 2, W + 2, C1), jnp.bfloat16),   # halo buffer
                pltpu.VMEM((HW, C2), jnp.float32),              # conv2 accumulator
            ],
        ),
        compiler_params=pltpu.CompilerParams(
            dimension_semantics=("parallel",),
            vmem_limit_bytes=_vmem_limit(blk, scr),
        ),
    )(p1.astype(jnp.bfloat16), w1.astype(jnp.bfloat16),
      b1.astype(jnp.float32).reshape(1, C1), w2.astype(jnp.bfloat16),
      b2.astype(jnp.float32).reshape(1, C2))
    return out[:, 0, :]


def fusion_head(text_feat, audio_feat, w, b):
    B, DT = text_feat.shape
    NC = w.shape[1]
    w = w.astype(jnp.bfloat16)
    wt, wa = w[:DT, :], w[DT:, :]            # static split == concat-then-matmul
    return pl.pallas_call(
        _fusion_head_kernel,
        out_shape=jax.ShapeDtypeStruct((B, NC), jnp.float32),
    )(text_feat.astype(jnp.bfloat16), audio_feat.astype(jnp.bfloat16),
      wt, wa, b.astype(jnp.float32).reshape(1, NC))


# ================================ glue =======================================
def im2col_3x3(x_nhwc):
    """3x3, stride 1, pad 1 patches (conv1 only: 27 values/pixel, negligible HBM)."""
    B, H, W, C = x_nhwc.shape
    xp = jnp.pad(x_nhwc, ((0, 0), (1, 1), (1, 1), (0, 0)))
    cols = [xp[:, di:di + H, dj:dj + W, :] for di in range(3) for dj in range(3)]
    return jnp.concatenate(cols, axis=-1)


def init_params(key, num_classes, seq_len):
    def nrm(k, shape, scale=0.02, dtype=jnp.float32):
        return (scale * jax.random.normal(k, shape, dtype=jnp.float32)).astype(dtype)

    keys = iter(jax.random.split(key, 64))
    conv1_w = nrm(next(keys), (CONV1_K, CONV1_CH))
    conv1_w = jnp.pad(conv1_w, ((0, CONV1_K_PAD - CONV1_K), (0, 0))).astype(jnp.bfloat16)

    params = {
        "word_emb": nrm(next(keys), (VOCAB, HIDDEN)),
        "pos_emb": nrm(next(keys), (seq_len, HIDDEN)),
        "emb_ln_g": jnp.ones((HIDDEN,), jnp.float32),
        "emb_ln_b": jnp.zeros((HIDDEN,), jnp.float32),
        "layers": [],
        "conv1_w": conv1_w,
        "conv1_b": jnp.zeros((CONV1_CH,), jnp.float32),
        "conv2_w": nrm(next(keys), (9, CONV1_CH, AUDIO_FEAT), dtype=jnp.bfloat16),
        "conv2_b": jnp.zeros((AUDIO_FEAT,), jnp.float32),
        "fc1_w": nrm(next(keys), (HIDDEN + AUDIO_FEAT, num_classes), dtype=jnp.bfloat16),
        "fc1_b": jnp.zeros((num_classes,), jnp.float32),
    }
    for _ in range(NUM_LAYERS):
        params["layers"].append({
            "w_qkv": nrm(next(keys), (HIDDEN, 3 * HIDDEN), dtype=jnp.bfloat16),
            "b_qkv": jnp.zeros((3 * HIDDEN,), jnp.float32),
            "w_o": nrm(next(keys), (HIDDEN, HIDDEN), dtype=jnp.bfloat16),
            "b_o": jnp.zeros((HIDDEN,), jnp.float32),
            "ln1_g": jnp.ones((HIDDEN,), jnp.float32),
            "ln1_b": jnp.zeros((HIDDEN,), jnp.float32),
            "w_ff1": nrm(next(keys), (HIDDEN, FFN), dtype=jnp.bfloat16),
            "b_ff1": jnp.zeros((FFN,), jnp.float32),
            "w_ff2": nrm(next(keys), (FFN, HIDDEN), dtype=jnp.bfloat16),
            "b_ff2": jnp.zeros((HIDDEN,), jnp.float32),
            "ln2_g": jnp.ones((HIDDEN,), jnp.float32),
            "ln2_b": jnp.zeros((HIDDEN,), jnp.float32),
        })
    return params


def audio_text_encode_forward(params, input_ids, attention_mask, audio_nchw):
    B, S = input_ids.shape

    # ---------------- text branch: BERT-like encoder, CLS pooled -------------
    emb = jnp.take(params["word_emb"], input_ids, axis=0) + params["pos_emb"][None]
    x = layernorm(emb.reshape(B * S, HIDDEN), params["emb_ln_g"], params["emb_ln_b"])

    mask_bias = (1.0 - attention_mask.astype(jnp.float32)) * -1e9            # (B, S)
    mask_bias = jnp.broadcast_to(mask_bias.reshape(B, 1, 1, S),
                                 (B, NUM_HEADS, 1, S)).reshape(B * NUM_HEADS, 1, S)

    for lyr in params["layers"]:
        qkv = linear(x, lyr["w_qkv"], lyr["b_qkv"])                          # (B*S, 3H)
        qkv = qkv.reshape(B, S, 3, NUM_HEADS, HEAD_DIM).transpose(2, 0, 3, 1, 4)
        q = qkv[0].reshape(B * NUM_HEADS, S, HEAD_DIM)
        k = qkv[1].reshape(B * NUM_HEADS, S, HEAD_DIM)
        v = qkv[2].reshape(B * NUM_HEADS, S, HEAD_DIM)
        ao = attention(q, k, v, mask_bias)                                   # (B*nH,S,dh)
        ao = ao.reshape(B, NUM_HEADS, S, HEAD_DIM).transpose(0, 2, 1, 3)
        ao = ao.reshape(B * S, HIDDEN)
        # out-proj with residual-add + LayerNorm fused into the matmul epilogue
        x = linear(ao, lyr["w_o"], lyr["b_o"],
                   residual=x, ln_gamma=lyr["ln1_g"], ln_beta=lyr["ln1_b"])
        ff = linear(x, lyr["w_ff1"], lyr["b_ff1"], activation="gelu")
        x = linear(ff, lyr["w_ff2"], lyr["b_ff2"],
                   residual=x, ln_gamma=lyr["ln2_g"], ln_beta=lyr["ln2_b"])

    text_cls = x.reshape(B, S, HIDDEN)[:, 0, :]                              # (B, 768)

    # ---------------- audio branch: fused conv1 + conv2 + GAP ----------------
    # TODO(synk): pretrained ResNet-152 (50+ bottleneck blocks) replaced by a
    # 2-conv synthetic stack producing the same pooled 2048-d feature.
    a = jnp.transpose(audio_nchw, (0, 2, 3, 1))                              # NCHW->NHWC
    Ba, Ha, Wa, Ca = a.shape
    p1 = im2col_3x3(a).reshape(Ba, Ha * Wa, 9 * Ca)
    p1 = jnp.pad(p1, ((0, 0), (0, 0), (0, CONV1_K_PAD - 9 * Ca)))            # K -> 128
    audio_feat = audio_branch(p1, params["conv1_w"], params["conv1_b"],
                              params["conv2_w"], params["conv2_b"], Ha, Wa)  # (B, 2048)

    # ---------------- fusion head: cat -> dropout(eval) -> fc1 ---------------
    preds = fusion_head(text_cls, audio_feat, params["fc1_w"], params["fc1_b"])
    return preds


# ================================ main =======================================
if __name__ == "__main__":
    B, S = 2, 8
    NUM_CLASSES = 5
    AUDIO_SHAPE = (B, 3, 16, 16)   # NCHW, like a spectrogram fed to ResNet

    key = jax.random.PRNGKey(0)
    k_ids, k_audio, k_params = jax.random.split(key, 3)

    input_ids = jax.random.randint(k_ids, (B, S), 0, VOCAB, dtype=jnp.int32)
    attention_mask = jnp.ones((B, S), dtype=jnp.int32).at[1, 6:].set(0)
    audio = jax.random.normal(k_audio, AUDIO_SHAPE, dtype=jnp.float32)

    params = init_params(k_params, NUM_CLASSES, S)

    preds = audio_text_encode_forward(params, input_ids, attention_mask, audio)
    preds = jax.block_until_ready(preds)
    assert preds.shape == (B, NUM_CLASSES), preds.shape
    assert bool(jnp.all(jnp.isfinite(preds)))
    print("KERNEL_OK")
</pallas_src>

<mosaic_0001>
module attributes {stable_mosaic.version = 11 : i64} {
  func.func @_layernorm_kernel(%arg0: memref<16x768xf32, #tpu.memory_space<vmem>>, %arg1: memref<1x768xf32, #tpu.memory_space<vmem>>, %arg2: memref<1x768xf32, #tpu.memory_space<vmem>>, %arg3: memref<16x768xbf16, #tpu.memory_space<vmem>>) attributes {dimension_semantics = [], scalar_prefetch = 0 : i64, scratch_operands = 0 : i64, tpu.core_type = #tpu.core_type<tc>} {
    %c0 = arith.constant 0 : index
    %c0_0 = arith.constant 0 : index
    %0 = vector.load %arg0[%c0, %c0_0] : memref<16x768xf32, #tpu.memory_space<vmem>>, vector<16x768xf32>
    %cst = arith.constant dense<0.000000e+00> : vector<16xf32>
    %1 = vector.multi_reduction <add>, %0, %cst [1] : vector<16x768xf32> to vector<16xf32>
    %2 = vector.shape_cast %1 : vector<16xf32> to vector<16x1xf32>
    %cst_1 = arith.constant 7.680000e+02 : f32
    %3 = vector.broadcast %cst_1 : f32 to vector<16x1xf32>
    %4 = arith.divf %2, %3 : vector<16x1xf32>
    %5 = vector.broadcast %4 : vector<16x1xf32> to vector<16x768xf32>
    %6 = arith.subf %0, %5 : vector<16x768xf32>
    %7 = vector.broadcast %4 : vector<16x1xf32> to vector<16x768xf32>
    %8 = arith.subf %0, %7 : vector<16x768xf32>
    %9 = arith.mulf %6, %8 : vector<16x768xf32>
    %cst_2 = arith.constant dense<0.000000e+00> : vector<16xf32>
    %10 = vector.multi_reduction <add>, %9, %cst_2 [1] : vector<16x768xf32> to vector<16xf32>
    %11 = vector.shape_cast %10 : vector<16xf32> to vector<16x1xf32>
    %cst_3 = arith.constant 7.680000e+02 : f32
    %12 = vector.broadcast %cst_3 : f32 to vector<16x1xf32>
    %13 = arith.divf %11, %12 : vector<16x1xf32>
    %14 = vector.broadcast %4 : vector<16x1xf32> to vector<16x768xf32>
    %15 = arith.subf %0, %14 : vector<16x768xf32>
    %cst_4 = arith.constant 9.99999996E-13 : f32
    %16 = vector.broadcast %cst_4 : f32 to vector<16x1xf32>
    %17 = arith.addf %13, %16 : vector<16x1xf32>
    %18 = math.rsqrt %17 : vector<16x1xf32>
    %19 = vector.broadcast %18 : vector<16x1xf32> to vector<16x768xf32>
    %20 = arith.mulf %15, %19 : vector<16x768xf32>
    %c0_5 = arith.constant 0 : index
    %c0_6 = arith.constant 0 : index
    %21 = vector.load %arg1[%c0_5, %c0_6] : memref<1x768xf32, #tpu.memory_space<vmem>>, vector<1x768xf32>
    %22 = vector.broadcast %21 : vector<1x768xf32> to vector<16x768xf32>
    %23 = arith.mulf %20, %22 : vector<16x768xf32>
    %c0_7 = arith.constant 0 : index
    %c0_8 = arith.constant 0 : index
    %24 = vector.load %arg2[%c0_7, %c0_8] : memref<1x768xf32, #tpu.memory_space<vmem>>, vector<1x768xf32>
    %25 = vector.broadcast %24 : vector<1x768xf32> to vector<16x768xf32>
    %26 = arith.addf %23, %25 : vector<16x768xf32>
    %27 = arith.truncf %26 : vector<16x768xf32> to vector<16x768xbf16>
    %c0_9 = arith.constant 0 : index
    %c0_10 = arith.constant 0 : index
    %28 = vector.load %arg3[%c0_9, %c0_10] : memref<16x768xbf16, #tpu.memory_space<vmem>>, vector<16x768xbf16>
    tpu.vector_store %arg3[%c0_9, %c0_10], %27 {strides = array<i32>} : memref<16x768xbf16, #tpu.memory_space<vmem>>, vector<16x768xbf16>,
    return
  }
}

</mosaic_0001>

<llo_original>
// kernel: tpu_custom_call.1
$region0: #{tpu_custom_call.1}
  #allocation0 [shape = 'u32[]', space=smem, size = 0x4, offset = 0x4, fixed_abs, tag = 'smem constant byte address 0x4 - core index']
  #allocation1 [shape = 'u32[144,128]{1,0:T(1,128)}', space=vmem, size = 0x12000, scoped, tag = 'internal scratch']
  %s0 = inlined_call_operand.hbm [shape: f32[16,768], index: 0, kind: input, shape index: {}]
  %s1 = inlined_call_operand.hbm [shape: f32[1,768], index: 1, kind: input, shape index: {}]
  %s2 = inlined_call_operand.hbm [shape: f32[1,768], index: 2, kind: input, shape index: {}]
  %s3 = inlined_call_operand.hbm [shape: bf16[16,768], index: 3, kind: output, shape index: {}]
  %s4 = sld [smem:[#allocation0]]
  $region34: #{tpu_custom_call.1} parent=0
    _
  %s6 = ssub.s32 1, %s4
  %s7 = scalar_select 0, %s6, %s4
  $region1: #{tpu_custom_call.1} parent=0
    #allocation2 [shape = 'u8[49152]{0}', space=vmem, size = 0xc000, scoped, tag = 'input window, operand 0, single buffered']
    #allocation3 [shape = 's32[1]{0}', space=sflag, size = 0x4, scoped, tag = 'scoped memory for tpu_custom_call.1']
    #allocation4 [shape = 's32[1]{0}', space=sflag, size = 0x4, scoped, tag = 'scoped memory for tpu_custom_call.1']
    #allocation5 [shape = 'u8[3072]{0}', space=vmem, size = 0xc00, scoped, tag = 'input window, operand 1, single buffered']
    #allocation6 [shape = 's32[1]{0}', space=sflag, size = 0x4, scoped, tag = 'scoped memory for tpu_custom_call.1']
    #allocation7 [shape = 'u8[3072]{0}', space=vmem, size = 0xc00, scoped, tag = 'input window, operand 2, single buffered']
    #allocation8 [shape = 'u8[24576]{0}', space=vmem, size = 0x6000, scoped, tag = 'output window, operand 0, single buffered']
    %8 = vsyncpa [#allocation3], 0
    %9 = vsyncpa [#allocation6], 0
    %10 = vsyncpa [#allocation4], 0
    // Predicated region
    $region2: #{tpu_custom_call.1} parent=1 // pred_check
      _
    $region3: #{tpu_custom_call.1} parent=1 // pred_check_branch
      %12 = sbr.rel (0) target = $region5
    $region4: #{tpu_custom_call.1} parent=1 // pred_region
      %s14 = ssub.s32 1536, 1536
      %15 = vsyncadd [#allocation3], %s14
      %s16 = sshll.u32 [#allocation2], 4
      %s17 = int_to_ptr.vmem [resolvable:$true] %s16
      %22 = dma.hbm_to_vmem [thread:$0]  %s0, 1536, %s17, [#allocation3], 768, 768, 48
    $region5: #{tpu_custom_call.1} parent=1 // pred_fallthru
      _
    // Predicated region
    $region6: #{tpu_custom_call.1} parent=1 // pred_check
      _
    $region7: #{tpu_custom_call.1} parent=1 // pred_check_branch
      %24 = sbr.rel (0) target = $region9
    $region8: #{tpu_custom_call.1} parent=1 // pred_region
      %s26 = ssub.s32 96, 96
      %27 = vsyncadd [#allocation6], %s26
      %s29 = sshll.u32 [#allocation5], 4
      %s30 = int_to_ptr.vmem [resolvable:$true] %s29
      %32 = dma.hbm_to_vmem [thread:$0]  %s1, 96, %s30, [#allocation6]
    $region9: #{tpu_custom_call.1} parent=1 // pred_fallthru
      _
    // Predicated region
    $region10: #{tpu_custom_call.1} parent=1 // pred_check
      _
    $region11: #{tpu_custom_call.1} parent=1 // pred_check_branch
      %34 = sbr.rel (0) target = $region13
    $region12: #{tpu_custom_call.1} parent=1 // pred_region
      %s36 = ssub.s32 96, 96
      %37 = vsyncadd [#allocation6], %s36
      %s39 = sshll.u32 [#allocation7], 4
      %s40 = int_to_ptr.vmem [resolvable:$true] %s39
      %42 = dma.hbm_to_vmem [thread:$0]  %s2, 96, %s40, [#allocation6]
    $region13: #{tpu_custom_call.1} parent=1 // pred_fallthru
      _
    // Predicated region
    $region14: #{tpu_custom_call.1} parent=1 // pred_check
      _
    $region15: #{tpu_custom_call.1} parent=1 // pred_check_branch
      %44 = sbr.rel (0) target = $region17
    $region16: #{tpu_custom_call.1} parent=1 // pred_region
      %45 = dma.done [#allocation3], 1536
    $region17: #{tpu_custom_call.1} parent=1 // pred_fallthru
      _
    // Predicated region
    $region18: #{tpu_custom_call.1} parent=1 // pred_check
      _
    $region19: #{tpu_custom_call.1} parent=1 // pred_check_branch
      %47 = sbr.rel (0) target = $region21
    $region20: #{tpu_custom_call.1} parent=1 // pred_region
      %48 = dma.done [#allocation6], 96
    $region21: #{tpu_custom_call.1} parent=1 // pred_fallthru
      _
    // Predicated region
    $region22: #{tpu_custom_call.1} parent=1 // pred_check
      _
    $region23: #{tpu_custom_call.1} parent=1 // pred_check_branch
      %50 = sbr.rel (0) target = $region25
    $region24: #{tpu_custom_call.1} parent=1 // pred_region
      %51 = dma.done [#allocation6], 96
    $region25: #{tpu_custom_call.1} parent=1 // pred_fallthru
      _
    %v52 = vld [vmem:[#allocation2] sm:$0xff]
    %v53 = vld [vmem:[#allocation2 + $0x8] sm:$0xff]
    %v54 = vld [vmem:[#allocation2 + $0x10] sm:$0xff]
    %v55 = vld [vmem:[#allocation2 + $0x18] sm:$0xff]
    %v56 = vld [vmem:[#allocation2 + $0x20] sm:$0xff]
    %v57 = vld [vmem:[#allocation2 + $0x28] sm:$0xff]
    %v58 = vld [vmem:[#allocation2 + $0x30] sm:$0xff]
    %v59 = vld [vmem:[#allocation2 + $0x38] sm:$0xff]
    %v60 = vld [vmem:[#allocation2 + $0x40] sm:$0xff]
    %v61 = vld [vmem:[#allocation2 + $0x48] sm:$0xff]
    %v62 = vld [vmem:[#allocation2 + $0x50] sm:$0xff]
    %v63 = vld [vmem:[#allocation2 + $0x58] sm:$0xff]
    %v64 = vadd.f32 %v52, %v53
    %v65 = vadd.f32 %v64, %v54
    %v66 = vadd.f32 %v65, %v55
    %v67 = vadd.f32 %v66, %v56
    %v68 = vadd.f32 %v67, %v57
    %69 = vadd.xlane.f32.xlu0 %v68
    %v70 = vpop.xlane.xlu0 %69
    %v71 = vadd.f32 %v58, %v59
    %v72 = vadd.f32 %v71, %v60
    %v73 = vadd.f32 %v72, %v61
    %v74 = vadd.f32 %v73, %v62
    %v75 = vadd.f32 %v74, %v63
    %76 = vadd.xlane.f32.xlu0 %v75
    %v77 = vpop.xlane.xlu0 %76
    %v78 = vrcp.pop 768.0
    %v79 = vmul.f32 %v70, %v78
    %v80 = vmul.f32 %v77, %v78
    %v81 = vsub.f32 %v52, %v79
    %v82 = vsub.f32 %v53, %v79
    %v83 = vsub.f32 %v54, %v79
    %v84 = vsub.f32 %v55, %v79
    %v85 = vsub.f32 %v56, %v79
    %v86 = vsub.f32 %v57, %v79
    %v87 = vsub.f32 %v58, %v80
    %v88 = vsub.f32 %v59, %v80
    %v89 = vsub.f32 %v60, %v80
    %v90 = vsub.f32 %v61, %v80
    %v91 = vsub.f32 %v62, %v80
    %v92 = vsub.f32 %v63, %v80
    %v93 = vmul.f32 %v81, %v81
    %v94 = vmul.f32 %v82, %v82
    %v95 = vmul.f32 %v83, %v83
    %v96 = vmul.f32 %v84, %v84
    %v97 = vmul.f32 %v85, %v85
    %v98 = vmul.f32 %v86, %v86
    %v99 = vmul.f32 %v87, %v87
    %v100 = vmul.f32 %v88, %v88
    %v101 = vmul.f32 %v89, %v89
    %v102 = vmul.f32 %v90, %v90
    %v103 = vmul.f32 %v91, %v91
    %v104 = vmul.f32 %v92, %v92
    %v105 = vadd.f32 %v93, %v94
    %v106 = vadd.f32 %v105, %v95
    %v107 = vadd.f32 %v106, %v96
    %v108 = vadd.f32 %v107, %v97
    %v109 = vadd.f32 %v108, %v98
    %110 = vadd.xlane.f32.xlu0 %v109
    %v111 = vpop.xlane.xlu0 %110
    %v112 = vadd.f32 %v99, %v100
    %v113 = vadd.f32 %v112, %v101
    %v114 = vadd.f32 %v113, %v102
    %v115 = vadd.f32 %v114, %v103
    %v116 = vadd.f32 %v115, %v104
    %117 = vadd.xlane.f32.xlu0 %v116
    %v118 = vpop.xlane.xlu0 %117
    %v119 = vmul.f32 %v111, %v78
    %v120 = vmul.f32 %v118, %v78
    %v121 = vadd.f32 %v119, 1e-12
    %v122 = vadd.f32 %v120, 1e-12
    %v123 = vrsqrt.pop %v121
    %v124 = vrsqrt.pop %v122
    %v125 = vmul.f32 %v81, %v123
    %v126 = vmul.f32 %v82, %v123
    %v127 = vmul.f32 %v83, %v123
    %v128 = vmul.f32 %v84, %v123
    %v129 = vmul.f32 %v85, %v123
    %v130 = vmul.f32 %v86, %v123
    %v131 = vmul.f32 %v87, %v124
    %v132 = vmul.f32 %v88, %v124
    %v133 = vmul.f32 %v89, %v124
    %v134 = vmul.f32 %v90, %v124
    %v135 = vmul.f32 %v91, %v124
    %v136 = vmul.f32 %v92, %v124
    %v137 = vld [vmem:[#allocation5] sm:$0x3f]
    %v139 = vlaneseq
    %v140 = vshrl.u32 %v139, 7
    %v141 = vsub.s32 0, %v140
    %v142 = vrot.slane %v137, %v141
    %v143 = vlaneseq
    %v144 = vshrl.u32 %v143, 7
    %v145 = vsub.s32 1, %v144
    %v146 = vrot.slane %v137, %v145
    %v147 = vlaneseq
    %v148 = vshrl.u32 %v147, 7
    %v149 = vsub.s32 2, %v148
    %v150 = vrot.slane %v137, %v149
    %v151 = vlaneseq
    %v152 = vshrl.u32 %v151, 7
    %v153 = vsub.s32 3, %v152
    %v154 = vrot.slane %v137, %v153
    %v155 = vlaneseq
    %v156 = vshrl.u32 %v155, 7
    %v157 = vsub.s32 4, %v156
    %v158 = vrot.slane %v137, %v157
    %v159 = vlaneseq
    %v160 = vshrl.u32 %v159, 7
    %v161 = vsub.s32 5, %v160
    %v162 = vrot.slane %v137, %v161
    %v169 = vmul.f32 %v125, %v142
    %v170 = vmul.f32 %v126, %v146
    %v171 = vmul.f32 %v127, %v150
    %v172 = vmul.f32 %v128, %v154
    %v173 = vmul.f32 %v129, %v158
    %v174 = vmul.f32 %v130, %v162
    %v175 = vmul.f32 %v131, %v142
    %v176 = vmul.f32 %v132, %v146
    %v177 = vmul.f32 %v133, %v150
    %v178 = vmul.f32 %v134, %v154
    %v179 = vmul.f32 %v135, %v158
    %v180 = vmul.f32 %v136, %v162
    %v181 = vld [vmem:[#allocation7] sm:$0x3f]
    %v183 = vlaneseq
    %v184 = vshrl.u32 %v183, 7
    %v185 = vsub.s32 0, %v184
    %v186 = vrot.slane %v181, %v185
    %v187 = vlaneseq
    %v188 = vshrl.u32 %v187, 7
    %v189 = vsub.s32 1, %v188
    %v190 = vrot.slane %v181, %v189
    %v191 = vlaneseq
    %v192 = vshrl.u32 %v191, 7
    %v193 = vsub.s32 2, %v192
    %v194 = vrot.slane %v181, %v193
    %v195 = vlaneseq
    %v196 = vshrl.u32 %v195, 7
    %v197 = vsub.s32 3, %v196
    %v198 = vrot.slane %v181, %v197
    %v199 = vlaneseq
    %v200 = vshrl.u32 %v199, 7
    %v201 = vsub.s32 4, %v200
    %v202 = vrot.slane %v181, %v201
    %v203 = vlaneseq
    %v204 = vshrl.u32 %v203, 7
    %v205 = vsub.s32 5, %v204
    %v206 = vrot.slane %v181, %v205
    %v213 = vadd.f32 %v169, %v186
    %v214 = vadd.f32 %v170, %v190
    %v215 = vadd.f32 %v171, %v194
    %v216 = vadd.f32 %v172, %v198
    %v217 = vadd.f32 %v173, %v202
    %v218 = vadd.f32 %v174, %v206
    %v219 = vadd.f32 %v175, %v186
    %v220 = vadd.f32 %v176, %v190
    %v221 = vadd.f32 %v177, %v194
    %v222 = vadd.f32 %v178, %v198
    %v223 = vadd.f32 %v179, %v202
    %v224 = vadd.f32 %v180, %v206
    %v225 = vpack.c.bf16 %v219, %v213
    %v226 = vpack.c.bf16 %v220, %v214
    %v227 = vpack.c.bf16 %v221, %v215
    %v228 = vpack.c.bf16 %v222, %v216
    %v229 = vpack.c.bf16 %v223, %v217
    %v230 = vpack.c.bf16 %v224, %v218
    %v237 = vunpack.c.l.b16 %v225
    %v238 = vunpack.c.l.b16 %v226
    %v239 = vunpack.c.l.b16 %v227
    %v240 = vunpack.c.l.b16 %v228
    %v241 = vunpack.c.l.b16 %v229
    %v242 = vunpack.c.l.b16 %v230
    %v243 = vunpack.c.h.b16 %v225
    %v244 = vunpack.c.h.b16 %v226
    %v245 = vunpack.c.h.b16 %v227
    %v246 = vunpack.c.h.b16 %v228
    %v247 = vunpack.c.h.b16 %v229
    %v248 = vunpack.c.h.b16 %v230
    %v249 = vpack.c.b16 %v238, %v237
    %v250 = vpack.c.b16 %v240, %v239
    %v251 = vpack.c.b16 %v242, %v241
    %v252 = vpack.c.b16 %v244, %v243
    %v253 = vpack.c.b16 %v246, %v245
    %v254 = vpack.c.b16 %v248, %v247
    %261 = vst [vmem:[#allocation8] sm:$0xff] %v249
    %262 = vst [vmem:[#allocation8 + $0x8] sm:$0xff] %v250
    %263 = vst [vmem:[#allocation8 + $0x10] sm:$0xff] %v251
    %264 = vst [vmem:[#allocation8 + $0x18] sm:$0xff] %v252
    %265 = vst [vmem:[#allocation8 + $0x20] sm:$0xff] %v253
    %266 = vst [vmem:[#allocation8 + $0x28] sm:$0xff] %v254
    // Predicated region
    $region26: #{tpu_custom_call.1} parent=1 // pred_check
      _
    $region27: #{tpu_custom_call.1} parent=1 // pred_check_branch
      %268 = sbr.rel (0) target = $region29
    $region28: #{tpu_custom_call.1} parent=1 // pred_region
      %s270 = ssub.s32 768, 768
      %271 = vsyncadd [#allocation4], %s270
      %s272 = sshll.u32 [#allocation8], 4
      %s273 = int_to_ptr.vmem [resolvable:$true] %s272
      %278 = dma.vmem_to_hbm [thread:$0]  %s273, 768, %s3, [#allocation4], 384, 384, 24
    $region29: #{tpu_custom_call.1} parent=1 // pred_fallthru
      _
    // Predicated region
    $region30: #{tpu_custom_call.1} parent=1 // pred_check
      _
    $region31: #{tpu_custom_call.1} parent=1 // pred_check_branch
      %280 = sbr.rel (0) target = $region33
    $region32: #{tpu_custom_call.1} parent=1 // pred_region
      %281 = dma.done [#allocation4], 768
    $region33: #{tpu_custom_call.1} parent=1 // pred_fallthru
      _
    %282 = vsyncpa [#allocation3], 1
    %283 = vsyncpa [#allocation6], 1
    %284 = vsyncpa [#allocation4], 1

</llo_original>
